<compile_context>
chip_gen: v5e
topology: v5e:2x2
jax: 0.10.0
libtpu: 0.0.40
codegen_flags: <defaults>
</compile_context>

<pallas_src>
import functools

import jax
import jax.numpy as jnp
from jax.experimental import pallas as pl
from jax.experimental.pallas import tpu as pltpu

N_BINS = 15
_LANES = 128
_SUBLANES = 8
_NUM_CORES = 2   # leading "parallel" grid axis; both TCs on v7x, harmless elsewhere


def _ece_kernel(logits_ref, labels_ref, out_ref, *, k_per_core, nblk, n_rem, needs_mask):
    """One grid step: accumulate per-bin cumulative signed sums of (probs - acc).

    out_ref: (N_BINS, 8, 128) f32 output block, resident across the row axis
    (same block index for every row step) -> per-core accumulator.  Slab b holds
    sum over processed elements of (probs - acc) * [probs > b/N_BINS], reduced
    only down to one (8,128) vreg per bin (VALU-only inner loop, no XLU).
    """
    i = pl.program_id(1)
    blk = pl.program_id(0) * k_per_core + i          # global row-block index

    @pl.when(i == 0)
    def _init():
        out_ref[...] = jnp.zeros_like(out_ref)

    def accumulate(valid_mask):
        logits = logits_ref[...].astype(jnp.float32)              # (brows, 128)
        probs = jax.nn.sigmoid(logits)                            # EUP
        pred = logits > 0.0                                       # == probs > 0.5, no EUP dep
        correct = (pred == (labels_ref[...] != 0)).astype(jnp.float32)
        diff = probs - correct
        if valid_mask is not None:
            diff = jnp.where(valid_mask, diff, 0.0)               # padded / OOB rows -> 0
        brows = logits.shape[0]
        if brows % _SUBLANES == 0:
            p3 = probs.reshape(brows // _SUBLANES, _SUBLANES, _LANES)
            d3 = diff.reshape(brows // _SUBLANES, _SUBLANES, _LANES)
            for b in range(N_BINS):
                sel = p3 > jnp.float32(b / N_BINS)
                out_ref[b, :, :] = out_ref[b, :, :] + jnp.sum(jnp.where(sel, d3, 0.0), axis=0)
        else:
            # Tiny single-block fallback (row count not a multiple of 8).
            for b in range(N_BINS):
                sel = probs > jnp.float32(b / N_BINS)
                part = jnp.sum(jnp.where(sel, diff, 0.0), axis=0, keepdims=True)
                out_ref[b, 0:1, :] = out_ref[b, 0:1, :] + part

    if needs_mask:
        @pl.when(blk < nblk - 1)
        def _full_blocks():
            accumulate(None)

        @pl.when(blk == nblk - 1)
        def _last_block():
            shape = logits_ref.shape
            idx = (jax.lax.broadcasted_iota(jnp.int32, shape, 0) * _LANES
                   + jax.lax.broadcasted_iota(jnp.int32, shape, 1))
            accumulate(idx < n_rem)
    else:
        @pl.when(blk < nblk)          # skip duplicated (clamped) steps when nblk % cores != 0
        def _all_blocks():
            accumulate(None)


def ece_pallas(logits: jax.Array, labels: jax.Array, *, block_rows: int = 2048) -> jax.Array:
    """Expected Calibration Error (15 bins). Returns shape (1,) float32 like torch."""
    n = logits.size
    assert labels.size == n and n > 0

    flat_logits = logits.reshape(-1)                 # free (row-major flatten)
    flat_labels = labels.reshape(-1)                 # native dtype, cast in-kernel
    if flat_labels.dtype == jnp.bool_:
        flat_labels = flat_labels.astype(jnp.int32)

    rows = -(-n // _LANES)
    pad = rows * _LANES - n
    if pad:
        # TODO(synk): for n % 128 != 0 this is still one full-array copy; a tiny
        # plain-JAX tail (<128 elems) combined with the raw per-bin outputs would
        # remove it for very large ragged inputs.
        flat_logits = jnp.pad(flat_logits, (0, pad))
        flat_labels = jnp.pad(flat_labels, (0, pad))
    logits2d = flat_logits.reshape(rows, _LANES)
    labels2d = flat_labels.reshape(rows, _LANES)

    # ---- tiling plan --------------------------------------------------------
    if rows <= block_rows:
        brows, nblk = rows, 1                          # single full block (always legal)
    else:
        brows = max(32, (block_rows // 32) * 32)       # 32-aligned: safe for packed label dtypes
        nblk = -(-rows // brows)
    cores = min(_NUM_CORES, nblk)
    k_per_core = -(-nblk // cores)
    needs_mask = (nblk * brows * _LANES != n)
    n_rem = n - (nblk - 1) * brows * _LANES            # valid elements in the last block

    kernel = functools.partial(_ece_kernel, k_per_core=k_per_core, nblk=nblk,
                               n_rem=n_rem, needs_mask=needs_mask)

    def in_map(c, i):
        # Clamp so ragged block counts never DMA out of bounds; the kernel skips
        # accumulation for those duplicated steps.
        return (jnp.minimum(c * k_per_core + i, nblk - 1), 0)

    raw = pl.pallas_call(
        kernel,
        out_shape=jax.ShapeDtypeStruct((cores, N_BINS, _SUBLANES, _LANES), jnp.float32),
        grid_spec=pltpu.PrefetchScalarGridSpec(
            num_scalar_prefetch=0,
            grid=(cores, k_per_core),
            in_specs=[
                pl.BlockSpec((brows, _LANES), in_map),     # logits (native dtype)
                pl.BlockSpec((brows, _LANES), in_map),     # labels (native dtype)
            ],
            out_specs=pl.BlockSpec((None, N_BINS, _SUBLANES, _LANES),
                                   lambda c, i: (c, 0, 0, 0)),
        ),
        compiler_params=pltpu.CompilerParams(
            dimension_semantics=("parallel", "arbitrary"),
        ),
    )(logits2d, labels2d)

    # raw[c, b] = per-core cumulative signed sums, reduced only to (8,128) slabs.
    # abs is applied AFTER summing cores/sublanes/lanes (exact rewrite).
    s = jnp.sum(raw, axis=(0, 2, 3))                                 # (N_BINS,)  S_b
    t = s - jnp.concatenate([s[1:], jnp.zeros((1,), s.dtype)])       # per-bin signed sums
    ece = jnp.sum(jnp.abs(t)) * jnp.float32(1.0 / n)
    return ece.reshape(1).astype(jnp.float32)


def ece_reference(logits: jax.Array, labels: jax.Array) -> jax.Array:
    """Pure-JAX reference mirroring the PyTorch loop (for validation)."""
    bins = jnp.linspace(0.0, 1.0, N_BINS + 1, dtype=jnp.float32)
    probs = jax.nn.sigmoid(logits.astype(jnp.float32))
    acc = (jnp.where(probs > 0.5, 1, 0) == labels.astype(jnp.int32)).astype(jnp.float32)
    n = probs.size
    ece = jnp.zeros((1,), jnp.float32)
    for i in range(N_BINS):
        in_bin = (probs > bins[i]) & (probs <= bins[i + 1])
        cnt = jnp.sum(in_bin)
        conf = jnp.sum(jnp.where(in_bin, probs, 0.0)) / jnp.maximum(cnt, 1)
        a = jnp.sum(jnp.where(in_bin, acc, 0.0)) / jnp.maximum(cnt, 1)
        ece = ece + jnp.where(cnt > 0, jnp.abs(conf - a) * (cnt / n), 0.0)
    return ece


if __name__ == "__main__":
    key = jax.random.PRNGKey(0)
    k1, k2, k3, k4, k5, k6 = jax.random.split(key, 6)

    # Case 1: 4-D input, single-block path (n divisible by 128, no masking).
    shape_a = (2, 4, 16, 16)
    logits_a = jax.random.normal(k1, shape_a, dtype=jnp.float32) * 2.0
    labels_a = jax.random.bernoulli(k2, 0.5, shape_a).astype(jnp.int32)
    out_a = jax.block_until_ready(ece_pallas(logits_a, labels_a))
    ref_a = jax.block_until_ready(ece_reference(logits_a, labels_a))
    assert out_a.shape == (1,)
    assert jnp.allclose(out_a, ref_a, atol=2e-5, rtol=1e-4), (out_a, ref_a)

    # Case 2: ragged size (n % 128 != 0), multi-block pipelined grid, 2-"core"
    # split, masked last block.
    shape_b = (5, 1000)
    logits_b = jax.random.normal(k3, shape_b, dtype=jnp.float32) * 3.0
    labels_b = jax.random.bernoulli(k4, 0.5, shape_b).astype(jnp.int32)
    out_b = jax.block_until_ready(ece_pallas(logits_b, labels_b, block_rows=32))
    ref_b = jax.block_until_ready(ece_reference(logits_b, labels_b))
    assert out_b.shape == (1,)
    assert jnp.allclose(out_b, ref_b, atol=2e-5, rtol=1e-4), (out_b, ref_b)

    # Case 3: odd number of row-blocks (exercises clamped duplicate-step skip)
    # plus a partially out-of-bounds final block.
    shape_c = (8, 4096)
    logits_c = jax.random.normal(k5, shape_c, dtype=jnp.float32) * 2.5
    labels_c = jax.random.bernoulli(k6, 0.5, shape_c).astype(jnp.int32)
    out_c = jax.block_until_ready(ece_pallas(logits_c, labels_c, block_rows=96))
    ref_c = jax.block_until_ready(ece_reference(logits_c, labels_c))
    assert jnp.allclose(out_c, ref_c, atol=2e-5, rtol=1e-4), (out_c, ref_c)

    # Case 4: exact multi-block division (no masking anywhere).
    out_d = jax.block_until_ready(ece_pallas(logits_c, labels_c, block_rows=64))
    assert jnp.allclose(out_d, ref_c, atol=2e-5, rtol=1e-4), (out_d, ref_c)

    print("KERNEL_OK")
</pallas_src>

<mosaic_0001>
module attributes {stable_mosaic.version = 11 : i64} {
  func.func @_ece_kernel(%arg0: i32, %arg1: i32, %arg2: memref<16x128xf32, #tpu.memory_space<vmem>>, %arg3: memref<16x128xi32, #tpu.memory_space<vmem>>, %arg4: memref<1x15x8x128xf32, #tpu.memory_space<vmem>>) attributes {dimension_semantics = [#tpu.dimension_semantics<parallel>, #tpu.dimension_semantics<arbitrary>], iteration_bounds = array<i64: 1, 1>, scalar_prefetch = 0 : i64, scratch_operands = 0 : i64, tpu.core_type = #tpu.core_type<tc>, window_params = [{transform_indices = @transform_0, window_bounds = array<i64: 16, 128>}, {transform_indices = @transform_1, window_bounds = array<i64: 16, 128>}, {transform_indices = @transform_2, window_bounds = array<i64: 1, 15, 8, 128>}]} {
    %c1_i32 = arith.constant 1 : i32
    %0 = arith.muli %arg0, %c1_i32 : i32
    %1 = arith.addi %0, %arg1 : i32
    %c0_i32 = arith.constant 0 : i32
    %2 = arith.cmpi eq, %arg1, %c0_i32 : i32
    %3 = arith.extui %2 : i1 to i32
    %c0_i32_0 = arith.constant 0 : i32
    %4 = arith.cmpi ne, %3, %c0_i32_0 : i32
    scf.if %4 {
      %cst = arith.constant 0.000000e+00 : f32
      %8 = vector.broadcast %cst : f32 to vector<15x8x128xf32>
      %c0 = arith.constant 0 : index
      %c0_3 = arith.constant 0 : index
      %c0_4 = arith.constant 0 : index
      %c0_5 = arith.constant 0 : index
      %9 = vector.load %arg4[%c0, %c0_3, %c0_4, %c0_5] : memref<1x15x8x128xf32, #tpu.memory_space<vmem>>, vector<1x15x8x128xf32>
      %10 = vector.shape_cast %9 : vector<1x15x8x128xf32> to vector<15x8x128xf32>
      %11 = vector.shape_cast %8 : vector<15x8x128xf32> to vector<1x15x8x128xf32>
      tpu.vector_store %arg4[%c0, %c0_3, %c0_4, %c0_5], %11 {strides = array<i32>} : memref<1x15x8x128xf32, #tpu.memory_space<vmem>>, vector<1x15x8x128xf32>,
    } else {
    }
    %c1_i32_1 = arith.constant 1 : i32
    %5 = arith.cmpi slt, %1, %c1_i32_1 : i32
    %6 = arith.extui %5 : i1 to i32
    %c0_i32_2 = arith.constant 0 : i32
    %7 = arith.cmpi ne, %6, %c0_i32_2 : i32
    scf.if %7 {
      %c0 = arith.constant 0 : index
      %c0_3 = arith.constant 0 : index
      %8 = vector.load %arg2[%c0, %c0_3] : memref<16x128xf32, #tpu.memory_space<vmem>>, vector<16x128xf32>
      %9 = arith.negf %8 : vector<16x128xf32>
      %10 = math.exp %9 : vector<16x128xf32>
      %cst = arith.constant 1.000000e+00 : f32
      %11 = vector.broadcast %cst : f32 to vector<16x128xf32>
      %12 = arith.addf %11, %10 : vector<16x128xf32>
      %13 = arith.divf %11, %12 : vector<16x128xf32>
      %cst_4 = arith.constant 0.000000e+00 : f32
      %14 = vector.broadcast %cst_4 : f32 to vector<16x128xf32>
      %15 = arith.cmpf ogt, %8, %14 : vector<16x128xf32>
      %c0_5 = arith.constant 0 : index
      %c0_6 = arith.constant 0 : index
      %16 = vector.load %arg3[%c0_5, %c0_6] : memref<16x128xi32, #tpu.memory_space<vmem>>, vector<16x128xi32>
      %c0_i32_7 = arith.constant 0 : i32
      %17 = vector.broadcast %c0_i32_7 : i32 to vector<16x128xi32>
      %18 = arith.cmpi ne, %16, %17 : vector<16x128xi32>
      %19 = arith.xori %15, %18 : vector<16x128xi1>
      %cst_8 = arith.constant dense<true> : vector<16x128xi1>
      %20 = arith.xori %19, %cst_8 : vector<16x128xi1>
      %21 = arith.extui %20 : vector<16x128xi1> to vector<16x128xi32>
      %22 = arith.sitofp %21 : vector<16x128xi32> to vector<16x128xf32>
      %23 = arith.subf %13, %22 : vector<16x128xf32>
      %24 = vector.shape_cast %13 : vector<16x128xf32> to vector<2x8x128xf32>
      %25 = vector.shape_cast %23 : vector<16x128xf32> to vector<2x8x128xf32>
      %cst_9 = arith.constant 0.000000e+00 : f32
      %26 = vector.broadcast %cst_9 : f32 to vector<2x8x128xf32>
      %27 = arith.cmpf ogt, %24, %26 : vector<2x8x128xf32>
      %c0_10 = arith.constant 0 : index
      %c0_11 = arith.constant 0 : index
      %c0_12 = arith.constant 0 : index
      %c0_13 = arith.constant 0 : index
      %28 = vector.load %arg4[%c0_10, %c0_11, %c0_12, %c0_13] : memref<1x15x8x128xf32, #tpu.memory_space<vmem>>, vector<1x1x8x128xf32>
      %29 = vector.shape_cast %28 : vector<1x1x8x128xf32> to vector<8x128xf32>
      %cst_14 = arith.constant 0.000000e+00 : f32
      %30 = vector.broadcast %cst_14 : f32 to vector<2x8x128xf32>
      %31 = arith.select %27, %25, %30 : vector<2x8x128xi1>, vector<2x8x128xf32>
      %cst_15 = arith.constant dense<0.000000e+00> : vector<8x128xf32>
      %32 = vector.multi_reduction <add>, %31, %cst_15 [0] : vector<2x8x128xf32> to vector<8x128xf32>
      %33 = arith.addf %29, %32 : vector<8x128xf32>
      %c0_16 = arith.constant 0 : index
      %c0_17 = arith.constant 0 : index
      %c0_18 = arith.constant 0 : index
      %c0_19 = arith.constant 0 : index
      %34 = vector.load %arg4[%c0_16, %c0_17, %c0_18, %c0_19] : memref<1x15x8x128xf32, #tpu.memory_space<vmem>>, vector<1x1x8x128xf32>
      %35 = vector.shape_cast %34 : vector<1x1x8x128xf32> to vector<8x128xf32>
      %36 = vector.shape_cast %33 : vector<8x128xf32> to vector<1x1x8x128xf32>
      tpu.vector_store %arg4[%c0_16, %c0_17, %c0_18, %c0_19], %36 {strides = array<i32>} : memref<1x15x8x128xf32, #tpu.memory_space<vmem>>, vector<1x1x8x128xf32>,
      %cst_20 = arith.constant 0.0666666701 : f32
      %37 = vector.broadcast %cst_20 : f32 to vector<2x8x128xf32>
      %38 = arith.cmpf ogt, %24, %37 : vector<2x8x128xf32>
      %c0_21 = arith.constant 0 : index
      %c1 = arith.constant 1 : index
      %c0_22 = arith.constant 0 : index
      %c0_23 = arith.constant 0 : index
      %39 = vector.load %arg4[%c0_21, %c1, %c0_22, %c0_23] : memref<1x15x8x128xf32, #tpu.memory_space<vmem>>, vector<1x1x8x128xf32>
      %40 = vector.shape_cast %39 : vector<1x1x8x128xf32> to vector<8x128xf32>
      %cst_24 = arith.constant 0.000000e+00 : f32
      %41 = vector.broadcast %cst_24 : f32 to vector<2x8x128xf32>
      %42 = arith.select %38, %25, %41 : vector<2x8x128xi1>, vector<2x8x128xf32>
      %cst_25 = arith.constant dense<0.000000e+00> : vector<8x128xf32>
      %43 = vector.multi_reduction <add>, %42, %cst_25 [0] : vector<2x8x128xf32> to vector<8x128xf32>
      %44 = arith.addf %40, %43 : vector<8x128xf32>
      %c0_26 = arith.constant 0 : index
      %c1_27 = arith.constant 1 : index
      %c0_28 = arith.constant 0 : index
      %c0_29 = arith.constant 0 : index
      %45 = vector.load %arg4[%c0_26, %c1_27, %c0_28, %c0_29] : memref<1x15x8x128xf32, #tpu.memory_space<vmem>>, vector<1x1x8x128xf32>
      %46 = vector.shape_cast %45 : vector<1x1x8x128xf32> to vector<8x128xf32>
      %47 = vector.shape_cast %44 : vector<8x128xf32> to vector<1x1x8x128xf32>
      tpu.vector_store %arg4[%c0_26, %c1_27, %c0_28, %c0_29], %47 {strides = array<i32>} : memref<1x15x8x128xf32, #tpu.memory_space<vmem>>, vector<1x1x8x128xf32>,
      %cst_30 = arith.constant 0.13333334 : f32
      %48 = vector.broadcast %cst_30 : f32 to vector<2x8x128xf32>
      %49 = arith.cmpf ogt, %24, %48 : vector<2x8x128xf32>
      %c0_31 = arith.constant 0 : index
      %c2 = arith.constant 2 : index
      %c0_32 = arith.constant 0 : index
      %c0_33 = arith.constant 0 : index
      %50 = vector.load %arg4[%c0_31, %c2, %c0_32, %c0_33] : memref<1x15x8x128xf32, #tpu.memory_space<vmem>>, vector<1x1x8x128xf32>
      %51 = vector.shape_cast %50 : vector<1x1x8x128xf32> to vector<8x128xf32>
      %cst_34 = arith.constant 0.000000e+00 : f32
      %52 = vector.broadcast %cst_34 : f32 to vector<2x8x128xf32>
      %53 = arith.select %49, %25, %52 : vector<2x8x128xi1>, vector<2x8x128xf32>
      %cst_35 = arith.constant dense<0.000000e+00> : vector<8x128xf32>
      %54 = vector.multi_reduction <add>, %53, %cst_35 [0] : vector<2x8x128xf32> to vector<8x128xf32>
      %55 = arith.addf %51, %54 : vector<8x128xf32>
      %c0_36 = arith.constant 0 : index
      %c2_37 = arith.constant 2 : index
      %c0_38 = arith.constant 0 : index
      %c0_39 = arith.constant 0 : index
      %56 = vector.load %arg4[%c0_36, %c2_37, %c0_38, %c0_39] : memref<1x15x8x128xf32, #tpu.memory_space<vmem>>, vector<1x1x8x128xf32>
      %57 = vector.shape_cast %56 : vector<1x1x8x128xf32> to vector<8x128xf32>
      %58 = vector.shape_cast %55 : vector<8x128xf32> to vector<1x1x8x128xf32>
      tpu.vector_store %arg4[%c0_36, %c2_37, %c0_38, %c0_39], %58 {strides = array<i32>} : memref<1x15x8x128xf32, #tpu.memory_space<vmem>>, vector<1x1x8x128xf32>,
      %cst_40 = arith.constant 2.000000e-01 : f32
      %59 = vector.broadcast %cst_40 : f32 to vector<2x8x128xf32>
      %60 = arith.cmpf ogt, %24, %59 : vector<2x8x128xf32>
      %c0_41 = arith.constant 0 : index
      %c3 = arith.constant 3 : index
      %c0_42 = arith.constant 0 : index
      %c0_43 = arith.constant 0 : index
      %61 = vector.load %arg4[%c0_41, %c3, %c0_42, %c0_43] : memref<1x15x8x128xf32, #tpu.memory_space<vmem>>, vector<1x1x8x128xf32>
      %62 = vector.shape_cast %61 : vector<1x1x8x128xf32> to vector<8x128xf32>
      %cst_44 = arith.constant 0.000000e+00 : f32
      %63 = vector.broadcast %cst_44 : f32 to vector<2x8x128xf32>
      %64 = arith.select %60, %25, %63 : vector<2x8x128xi1>, vector<2x8x128xf32>
      %cst_45 = arith.constant dense<0.000000e+00> : vector<8x128xf32>
      %65 = vector.multi_reduction <add>, %64, %cst_45 [0] : vector<2x8x128xf32> to vector<8x128xf32>
      %66 = arith.addf %62, %65 : vector<8x128xf32>
      %c0_46 = arith.constant 0 : index
      %c3_47 = arith.constant 3 : index
      %c0_48 = arith.constant 0 : index
      %c0_49 = arith.constant 0 : index
      %67 = vector.load %arg4[%c0_46, %c3_47, %c0_48, %c0_49] : memref<1x15x8x128xf32, #tpu.memory_space<vmem>>, vector<1x1x8x128xf32>
      %68 = vector.shape_cast %67 : vector<1x1x8x128xf32> to vector<8x128xf32>
      %69 = vector.shape_cast %66 : vector<8x128xf32> to vector<1x1x8x128xf32>
      tpu.vector_store %arg4[%c0_46, %c3_47, %c0_48, %c0_49], %69 {strides = array<i32>} : memref<1x15x8x128xf32, #tpu.memory_space<vmem>>, vector<1x1x8x128xf32>,
      %cst_50 = arith.constant 0.266666681 : f32
      %70 = vector.broadcast %cst_50 : f32 to vector<2x8x128xf32>
      %71 = arith.cmpf ogt, %24, %70 : vector<2x8x128xf32>
      %c0_51 = arith.constant 0 : index
      %c4 = arith.constant 4 : index
      %c0_52 = arith.constant 0 : index
      %c0_53 = arith.constant 0 : index
      %72 = vector.load %arg4[%c0_51, %c4, %c0_52, %c0_53] : memref<1x15x8x128xf32, #tpu.memory_space<vmem>>, vector<1x1x8x128xf32>
      %73 = vector.shape_cast %72 : vector<1x1x8x128xf32> to vector<8x128xf32>
      %cst_54 = arith.constant 0.000000e+00 : f32
      %74 = vector.broadcast %cst_54 : f32 to vector<2x8x128xf32>
      %75 = arith.select %71, %25, %74 : vector<2x8x128xi1>, vector<2x8x128xf32>
      %cst_55 = arith.constant dense<0.000000e+00> : vector<8x128xf32>
      %76 = vector.multi_reduction <add>, %75, %cst_55 [0] : vector<2x8x128xf32> to vector<8x128xf32>
      %77 = arith.addf %73, %76 : vector<8x128xf32>
      %c0_56 = arith.constant 0 : index
      %c4_57 = arith.constant 4 : index
      %c0_58 = arith.constant 0 : index
      %c0_59 = arith.constant 0 : index
      %78 = vector.load %arg4[%c0_56, %c4_57, %c0_58, %c0_59] : memref<1x15x8x128xf32, #tpu.memory_space<vmem>>, vector<1x1x8x128xf32>
      %79 = vector.shape_cast %78 : vector<1x1x8x128xf32> to vector<8x128xf32>
      %80 = vector.shape_cast %77 : vector<8x128xf32> to vector<1x1x8x128xf32>
      tpu.vector_store %arg4[%c0_56, %c4_57, %c0_58, %c0_59], %80 {strides = array<i32>} : memref<1x15x8x128xf32, #tpu.memory_space<vmem>>, vector<1x1x8x128xf32>,
      %cst_60 = arith.constant 0.333333343 : f32
      %81 = vector.broadcast %cst_60 : f32 to vector<2x8x128xf32>
      %82 = arith.cmpf ogt, %24, %81 : vector<2x8x128xf32>
      %c0_61 = arith.constant 0 : index
      %c5 = arith.constant 5 : index
      %c0_62 = arith.constant 0 : index
      %c0_63 = arith.constant 0 : index
      %83 = vector.load %arg4[%c0_61, %c5, %c0_62, %c0_63] : memref<1x15x8x128xf32, #tpu.memory_space<vmem>>, vector<1x1x8x128xf32>
      %84 = vector.shape_cast %83 : vector<1x1x8x128xf32> to vector<8x128xf32>
      %cst_64 = arith.constant 0.000000e+00 : f32
      %85 = vector.broadcast %cst_64 : f32 to vector<2x8x128xf32>
      %86 = arith.select %82, %25, %85 : vector<2x8x128xi1>, vector<2x8x128xf32>
      %cst_65 = arith.constant dense<0.000000e+00> : vector<8x128xf32>
      %87 = vector.multi_reduction <add>, %86, %cst_65 [0] : vector<2x8x128xf32> to vector<8x128xf32>
      %88 = arith.addf %84, %87 : vector<8x128xf32>
      %c0_66 = arith.constant 0 : index
      %c5_67 = arith.constant 5 : index
      %c0_68 = arith.constant 0 : index
      %c0_69 = arith.constant 0 : index
      %89 = vector.load %arg4[%c0_66, %c5_67, %c0_68, %c0_69] : memref<1x15x8x128xf32, #tpu.memory_space<vmem>>, vector<1x1x8x128xf32>
      %90 = vector.shape_cast %89 : vector<1x1x8x128xf32> to vector<8x128xf32>
      %91 = vector.shape_cast %88 : vector<8x128xf32> to vector<1x1x8x128xf32>
      tpu.vector_store %arg4[%c0_66, %c5_67, %c0_68, %c0_69], %91 {strides = array<i32>} : memref<1x15x8x128xf32, #tpu.memory_space<vmem>>, vector<1x1x8x128xf32>,
      %cst_70 = arith.constant 4.000000e-01 : f32
      %92 = vector.broadcast %cst_70 : f32 to vector<2x8x128xf32>
      %93 = arith.cmpf ogt, %24, %92 : vector<2x8x128xf32>
      %c0_71 = arith.constant 0 : index
      %c6 = arith.constant 6 : index
      %c0_72 = arith.constant 0 : index
      %c0_73 = arith.constant 0 : index
      %94 = vector.load %arg4[%c0_71, %c6, %c0_72, %c0_73] : memref<1x15x8x128xf32, #tpu.memory_space<vmem>>, vector<1x1x8x128xf32>
      %95 = vector.shape_cast %94 : vector<1x1x8x128xf32> to vector<8x128xf32>
      %cst_74 = arith.constant 0.000000e+00 : f32
      %96 = vector.broadcast %cst_74 : f32 to vector<2x8x128xf32>
      %97 = arith.select %93, %25, %96 : vector<2x8x128xi1>, vector<2x8x128xf32>
      %cst_75 = arith.constant dense<0.000000e+00> : vector<8x128xf32>
      %98 = vector.multi_reduction <add>, %97, %cst_75 [0] : vector<2x8x128xf32> to vector<8x128xf32>
      %99 = arith.addf %95, %98 : vector<8x128xf32>
      %c0_76 = arith.constant 0 : index
      %c6_77 = arith.constant 6 : index
      %c0_78 = arith.constant 0 : index
      %c0_79 = arith.constant 0 : index
      %100 = vector.load %arg4[%c0_76, %c6_77, %c0_78, %c0_79] : memref<1x15x8x128xf32, #tpu.memory_space<vmem>>, vector<1x1x8x128xf32>
      %101 = vector.shape_cast %100 : vector<1x1x8x128xf32> to vector<8x128xf32>
      %102 = vector.shape_cast %99 : vector<8x128xf32> to vector<1x1x8x128xf32>
      tpu.vector_store %arg4[%c0_76, %c6_77, %c0_78, %c0_79], %102 {strides = array<i32>} : memref<1x15x8x128xf32, #tpu.memory_space<vmem>>, vector<1x1x8x128xf32>,
      %cst_80 = arith.constant 0.466666669 : f32
      %103 = vector.broadcast %cst_80 : f32 to vector<2x8x128xf32>
      %104 = arith.cmpf ogt, %24, %103 : vector<2x8x128xf32>
      %c0_81 = arith.constant 0 : index
      %c7 = arith.constant 7 : index
      %c0_82 = arith.constant 0 : index
      %c0_83 = arith.constant 0 : index
      %105 = vector.load %arg4[%c0_81, %c7, %c0_82, %c0_83] : memref<1x15x8x128xf32, #tpu.memory_space<vmem>>, vector<1x1x8x128xf32>
      %106 = vector.shape_cast %105 : vector<1x1x8x128xf32> to vector<8x128xf32>
      %cst_84 = arith.constant 0.000000e+00 : f32
      %107 = vector.broadcast %cst_84 : f32 to vector<2x8x128xf32>
      %108 = arith.select %104, %25, %107 : vector<2x8x128xi1>, vector<2x8x128xf32>
      %cst_85 = arith.constant dense<0.000000e+00> : vector<8x128xf32>
      %109 = vector.multi_reduction <add>, %108, %cst_85 [0] : vector<2x8x128xf32> to vector<8x128xf32>
      %110 = arith.addf %106, %109 : vector<8x128xf32>
      %c0_86 = arith.constant 0 : index
      %c7_87 = arith.constant 7 : index
      %c0_88 = arith.constant 0 : index
      %c0_89 = arith.constant 0 : index
      %111 = vector.load %arg4[%c0_86, %c7_87, %c0_88, %c0_89] : memref<1x15x8x128xf32, #tpu.memory_space<vmem>>, vector<1x1x8x128xf32>
      %112 = vector.shape_cast %111 : vector<1x1x8x128xf32> to vector<8x128xf32>
      %113 = vector.shape_cast %110 : vector<8x128xf32> to vector<1x1x8x128xf32>
      tpu.vector_store %arg4[%c0_86, %c7_87, %c0_88, %c0_89], %113 {strides = array<i32>} : memref<1x15x8x128xf32, #tpu.memory_space<vmem>>, vector<1x1x8x128xf32>,
      %cst_90 = arith.constant 0.533333361 : f32
      %114 = vector.broadcast %cst_90 : f32 to vector<2x8x128xf32>
      %115 = arith.cmpf ogt, %24, %114 : vector<2x8x128xf32>
      %c0_91 = arith.constant 0 : index
      %c8 = arith.constant 8 : index
      %c0_92 = arith.constant 0 : index
      %c0_93 = arith.constant 0 : index
      %116 = vector.load %arg4[%c0_91, %c8, %c0_92, %c0_93] : memref<1x15x8x128xf32, #tpu.memory_space<vmem>>, vector<1x1x8x128xf32>
      %117 = vector.shape_cast %116 : vector<1x1x8x128xf32> to vector<8x128xf32>
      %cst_94 = arith.constant 0.000000e+00 : f32
      %118 = vector.broadcast %cst_94 : f32 to vector<2x8x128xf32>
      %119 = arith.select %115, %25, %118 : vector<2x8x128xi1>, vector<2x8x128xf32>
      %cst_95 = arith.constant dense<0.000000e+00> : vector<8x128xf32>
      %120 = vector.multi_reduction <add>, %119, %cst_95 [0] : vector<2x8x128xf32> to vector<8x128xf32>
      %121 = arith.addf %117, %120 : vector<8x128xf32>
      %c0_96 = arith.constant 0 : index
      %c8_97 = arith.constant 8 : index
      %c0_98 = arith.constant 0 : index
      %c0_99 = arith.constant 0 : index
      %122 = vector.load %arg4[%c0_96, %c8_97, %c0_98, %c0_99] : memref<1x15x8x128xf32, #tpu.memory_space<vmem>>, vector<1x1x8x128xf32>
      %123 = vector.shape_cast %122 : vector<1x1x8x128xf32> to vector<8x128xf32>
      %124 = vector.shape_cast %121 : vector<8x128xf32> to vector<1x1x8x128xf32>
      tpu.vector_store %arg4[%c0_96, %c8_97, %c0_98, %c0_99], %124 {strides = array<i32>} : memref<1x15x8x128xf32, #tpu.memory_space<vmem>>, vector<1x1x8x128xf32>,
      %cst_100 = arith.constant 6.000000e-01 : f32
      %125 = vector.broadcast %cst_100 : f32 to vector<2x8x128xf32>
      %126 = arith.cmpf ogt, %24, %125 : vector<2x8x128xf32>
      %c0_101 = arith.constant 0 : index
      %c9 = arith.constant 9 : index
      %c0_102 = arith.constant 0 : index
      %c0_103 = arith.constant 0 : index
      %127 = vector.load %arg4[%c0_101, %c9, %c0_102, %c0_103] : memref<1x15x8x128xf32, #tpu.memory_space<vmem>>, vector<1x1x8x128xf32>
      %128 = vector.shape_cast %127 : vector<1x1x8x128xf32> to vector<8x128xf32>
      %cst_104 = arith.constant 0.000000e+00 : f32
      %129 = vector.broadcast %cst_104 : f32 to vector<2x8x128xf32>
      %130 = arith.select %126, %25, %129 : vector<2x8x128xi1>, vector<2x8x128xf32>
      %cst_105 = arith.constant dense<0.000000e+00> : vector<8x128xf32>
      %131 = vector.multi_reduction <add>, %130, %cst_105 [0] : vector<2x8x128xf32> to vector<8x128xf32>
      %132 = arith.addf %128, %131 : vector<8x128xf32>
      %c0_106 = arith.constant 0 : index
      %c9_107 = arith.constant 9 : index
      %c0_108 = arith.constant 0 : index
      %c0_109 = arith.constant 0 : index
      %133 = vector.load %arg4[%c0_106, %c9_107, %c0_108, %c0_109] : memref<1x15x8x128xf32, #tpu.memory_space<vmem>>, vector<1x1x8x128xf32>
      %134 = vector.shape_cast %133 : vector<1x1x8x128xf32> to vector<8x128xf32>
      %135 = vector.shape_cast %132 : vector<8x128xf32> to vector<1x1x8x128xf32>
      tpu.vector_store %arg4[%c0_106, %c9_107, %c0_108, %c0_109], %135 {strides = array<i32>} : memref<1x15x8x128xf32, #tpu.memory_space<vmem>>, vector<1x1x8x128xf32>,
      %cst_110 = arith.constant 0.666666686 : f32
      %136 = vector.broadcast %cst_110 : f32 to vector<2x8x128xf32>
      %137 = arith.cmpf ogt, %24, %136 : vector<2x8x128xf32>
      %c0_111 = arith.constant 0 : index
      %c10 = arith.constant 10 : index
      %c0_112 = arith.constant 0 : index
      %c0_113 = arith.constant 0 : index
      %138 = vector.load %arg4[%c0_111, %c10, %c0_112, %c0_113] : memref<1x15x8x128xf32, #tpu.memory_space<vmem>>, vector<1x1x8x128xf32>
      %139 = vector.shape_cast %138 : vector<1x1x8x128xf32> to vector<8x128xf32>
      %cst_114 = arith.constant 0.000000e+00 : f32
      %140 = vector.broadcast %cst_114 : f32 to vector<2x8x128xf32>
      %141 = arith.select %137, %25, %140 : vector<2x8x128xi1>, vector<2x8x128xf32>
      %cst_115 = arith.constant dense<0.000000e+00> : vector<8x128xf32>
      %142 = vector.multi_reduction <add>, %141, %cst_115 [0] : vector<2x8x128xf32> to vector<8x128xf32>
      %143 = arith.addf %139, %142 : vector<8x128xf32>
      %c0_116 = arith.constant 0 : index
      %c10_117 = arith.constant 10 : index
      %c0_118 = arith.constant 0 : index
      %c0_119 = arith.constant 0 : index
      %144 = vector.load %arg4[%c0_116, %c10_117, %c0_118, %c0_119] : memref<1x15x8x128xf32, #tpu.memory_space<vmem>>, vector<1x1x8x128xf32>
      %145 = vector.shape_cast %144 : vector<1x1x8x128xf32> to vector<8x128xf32>
      %146 = vector.shape_cast %143 : vector<8x128xf32> to vector<1x1x8x128xf32>
      tpu.vector_store %arg4[%c0_116, %c10_117, %c0_118, %c0_119], %146 {strides = array<i32>} : memref<1x15x8x128xf32, #tpu.memory_space<vmem>>, vector<1x1x8x128xf32>,
      %cst_120 = arith.constant 0.733333349 : f32
      %147 = vector.broadcast %cst_120 : f32 to vector<2x8x128xf32>
      %148 = arith.cmpf ogt, %24, %147 : vector<2x8x128xf32>
      %c0_121 = arith.constant 0 : index
      %c11 = arith.constant 11 : index
      %c0_122 = arith.constant 0 : index
      %c0_123 = arith.constant 0 : index
      %149 = vector.load %arg4[%c0_121, %c11, %c0_122, %c0_123] : memref<1x15x8x128xf32, #tpu.memory_space<vmem>>, vector<1x1x8x128xf32>
      %150 = vector.shape_cast %149 : vector<1x1x8x128xf32> to vector<8x128xf32>
      %cst_124 = arith.constant 0.000000e+00 : f32
      %151 = vector.broadcast %cst_124 : f32 to vector<2x8x128xf32>
      %152 = arith.select %148, %25, %151 : vector<2x8x128xi1>, vector<2x8x128xf32>
      %cst_125 = arith.constant dense<0.000000e+00> : vector<8x128xf32>
      %153 = vector.multi_reduction <add>, %152, %cst_125 [0] : vector<2x8x128xf32> to vector<8x128xf32>
      %154 = arith.addf %150, %153 : vector<8x128xf32>
      %c0_126 = arith.constant 0 : index
      %c11_127 = arith.constant 11 : index
      %c0_128 = arith.constant 0 : index
      %c0_129 = arith.constant 0 : index
      %155 = vector.load %arg4[%c0_126, %c11_127, %c0_128, %c0_129] : memref<1x15x8x128xf32, #tpu.memory_space<vmem>>, vector<1x1x8x128xf32>
      %156 = vector.shape_cast %155 : vector<1x1x8x128xf32> to vector<8x128xf32>
      %157 = vector.shape_cast %154 : vector<8x128xf32> to vector<1x1x8x128xf32>
      tpu.vector_store %arg4[%c0_126, %c11_127, %c0_128, %c0_129], %157 {strides = array<i32>} : memref<1x15x8x128xf32, #tpu.memory_space<vmem>>, vector<1x1x8x128xf32>,
      %cst_130 = arith.constant 8.000000e-01 : f32
      %158 = vector.broadcast %cst_130 : f32 to vector<2x8x128xf32>
      %159 = arith.cmpf ogt, %24, %158 : vector<2x8x128xf32>
      %c0_131 = arith.constant 0 : index
      %c12 = arith.constant 12 : index
      %c0_132 = arith.constant 0 : index
      %c0_133 = arith.constant 0 : index
      %160 = vector.load %arg4[%c0_131, %c12, %c0_132, %c0_133] : memref<1x15x8x128xf32, #tpu.memory_space<vmem>>, vector<1x1x8x128xf32>
      %161 = vector.shape_cast %160 : vector<1x1x8x128xf32> to vector<8x128xf32>
      %cst_134 = arith.constant 0.000000e+00 : f32
      %162 = vector.broadcast %cst_134 : f32 to vector<2x8x128xf32>
      %163 = arith.select %159, %25, %162 : vector<2x8x128xi1>, vector<2x8x128xf32>
      %cst_135 = arith.constant dense<0.000000e+00> : vector<8x128xf32>
      %164 = vector.multi_reduction <add>, %163, %cst_135 [0] : vector<2x8x128xf32> to vector<8x128xf32>
      %165 = arith.addf %161, %164 : vector<8x128xf32>
      %c0_136 = arith.constant 0 : index
      %c12_137 = arith.constant 12 : index
      %c0_138 = arith.constant 0 : index
      %c0_139 = arith.constant 0 : index
      %166 = vector.load %arg4[%c0_136, %c12_137, %c0_138, %c0_139] : memref<1x15x8x128xf32, #tpu.memory_space<vmem>>, vector<1x1x8x128xf32>
      %167 = vector.shape_cast %166 : vector<1x1x8x128xf32> to vector<8x128xf32>
      %168 = vector.shape_cast %165 : vector<8x128xf32> to vector<1x1x8x128xf32>
      tpu.vector_store %arg4[%c0_136, %c12_137, %c0_138, %c0_139], %168 {strides = array<i32>} : memref<1x15x8x128xf32, #tpu.memory_space<vmem>>, vector<1x1x8x128xf32>,
      %cst_140 = arith.constant 0.866666674 : f32
      %169 = vector.broadcast %cst_140 : f32 to vector<2x8x128xf32>
      %170 = arith.cmpf ogt, %24, %169 : vector<2x8x128xf32>
      %c0_141 = arith.constant 0 : index
      %c13 = arith.constant 13 : index
      %c0_142 = arith.constant 0 : index
      %c0_143 = arith.constant 0 : index
      %171 = vector.load %arg4[%c0_141, %c13, %c0_142, %c0_143] : memref<1x15x8x128xf32, #tpu.memory_space<vmem>>, vector<1x1x8x128xf32>
      %172 = vector.shape_cast %171 : vector<1x1x8x128xf32> to vector<8x128xf32>
      %cst_144 = arith.constant 0.000000e+00 : f32
      %173 = vector.broadcast %cst_144 : f32 to vector<2x8x128xf32>
      %174 = arith.select %170, %25, %173 : vector<2x8x128xi1>, vector<2x8x128xf32>
      %cst_145 = arith.constant dense<0.000000e+00> : vector<8x128xf32>
      %175 = vector.multi_reduction <add>, %174, %cst_145 [0] : vector<2x8x128xf32> to vector<8x128xf32>
      %176 = arith.addf %172, %175 : vector<8x128xf32>
      %c0_146 = arith.constant 0 : index
      %c13_147 = arith.constant 13 : index
      %c0_148 = arith.constant 0 : index
      %c0_149 = arith.constant 0 : index
      %177 = vector.load %arg4[%c0_146, %c13_147, %c0_148, %c0_149] : memref<1x15x8x128xf32, #tpu.memory_space<vmem>>, vector<1x1x8x128xf32>
      %178 = vector.shape_cast %177 : vector<1x1x8x128xf32> to vector<8x128xf32>
      %179 = vector.shape_cast %176 : vector<8x128xf32> to vector<1x1x8x128xf32>
      tpu.vector_store %arg4[%c0_146, %c13_147, %c0_148, %c0_149], %179 {strides = array<i32>} : memref<1x15x8x128xf32, #tpu.memory_space<vmem>>, vector<1x1x8x128xf32>,
      %cst_150 = arith.constant 0.933333337 : f32
      %180 = vector.broadcast %cst_150 : f32 to vector<2x8x128xf32>
      %181 = arith.cmpf ogt, %24, %180 : vector<2x8x128xf32>
      %c0_151 = arith.constant 0 : index
      %c14 = arith.constant 14 : index
      %c0_152 = arith.constant 0 : index
      %c0_153 = arith.constant 0 : index
      %182 = vector.load %arg4[%c0_151, %c14, %c0_152, %c0_153] : memref<1x15x8x128xf32, #tpu.memory_space<vmem>>, vector<1x1x8x128xf32>
      %183 = vector.shape_cast %182 : vector<1x1x8x128xf32> to vector<8x128xf32>
      %cst_154 = arith.constant 0.000000e+00 : f32
      %184 = vector.broadcast %cst_154 : f32 to vector<2x8x128xf32>
      %185 = arith.select %181, %25, %184 : vector<2x8x128xi1>, vector<2x8x128xf32>
      %cst_155 = arith.constant dense<0.000000e+00> : vector<8x128xf32>
      %186 = vector.multi_reduction <add>, %185, %cst_155 [0] : vector<2x8x128xf32> to vector<8x128xf32>
      %187 = arith.addf %183, %186 : vector<8x128xf32>
      %c0_156 = arith.constant 0 : index
      %c14_157 = arith.constant 14 : index
      %c0_158 = arith.constant 0 : index
      %c0_159 = arith.constant 0 : index
      %188 = vector.load %arg4[%c0_156, %c14_157, %c0_158, %c0_159] : memref<1x15x8x128xf32, #tpu.memory_space<vmem>>, vector<1x1x8x128xf32>
      %189 = vector.shape_cast %188 : vector<1x1x8x128xf32> to vector<8x128xf32>
      %190 = vector.shape_cast %187 : vector<8x128xf32> to vector<1x1x8x128xf32>
      tpu.vector_store %arg4[%c0_156, %c14_157, %c0_158, %c0_159], %190 {strides = array<i32>} : memref<1x15x8x128xf32, #tpu.memory_space<vmem>>, vector<1x1x8x128xf32>,
    } else {
    }
    return
  }
  func.func @transform_0(%arg0: i32, %arg1: i32) -> (i32, i32) {
    %c1_i32 = arith.constant 1 : i32
    %0 = arith.muli %arg0, %c1_i32 : i32
    %1 = arith.addi %0, %arg1 : i32
    %c0_i32 = arith.constant 0 : i32
    %2 = arith.minsi %1, %c0_i32 : i32
    %c0_i32_0 = arith.constant 0 : i32
    %c0_i32_1 = arith.constant 0 : i32
    return %2, %c0_i32_0 : i32, i32
  }
  func.func @transform_1(%arg0: i32, %arg1: i32) -> (i32, i32) {
    %c1_i32 = arith.constant 1 : i32
    %0 = arith.muli %arg0, %c1_i32 : i32
    %1 = arith.addi %0, %arg1 : i32
    %c0_i32 = arith.constant 0 : i32
    %2 = arith.minsi %1, %c0_i32 : i32
    %c0_i32_0 = arith.constant 0 : i32
    %c0_i32_1 = arith.constant 0 : i32
    return %2, %c0_i32_0 : i32, i32
  }
  func.func @transform_2(%arg0: i32, %arg1: i32) -> (i32, i32, i32, i32) {
    %c0_i32 = arith.constant 0 : i32
    %c0_i32_0 = arith.constant 0 : i32
    %c0_i32_1 = arith.constant 0 : i32
    %c0_i32_2 = arith.constant 0 : i32
    return %arg0, %c0_i32, %c0_i32_0, %c0_i32_1 : i32, i32, i32, i32
  }
}

</mosaic_0001>

<llo_original>
// kernel: tpu_custom_call.1
$region0: #{tpu_custom_call.1}
  #allocation0 [shape = 'u32[]', space=smem, size = 0x4, offset = 0x4, fixed_abs, tag = 'smem constant byte address 0x4 - core index']
  #allocation1 [shape = 'u32[72,128]{1,0:T(1,128)}', space=vmem, size = 0x9000, scoped, tag = 'internal scratch']
  %s0 = inlined_call_operand.hbm [shape: f32[16,128], index: 0, kind: input, shape index: {}]
  %s1 = inlined_call_operand.hbm [shape: s32[16,128], index: 1, kind: input, shape index: {}]
  %s2 = inlined_call_operand.hbm [shape: f32[1,15,8,128], index: 2, kind: output, shape index: {}]
  %s3 = sld [smem:[#allocation0]]
  $region34: #{tpu_custom_call.1} parent=0
    _
  %s5 = ssub.s32 1, %s3
  %s6 = scalar_select 0, %s5, %s3
  $region1: #{tpu_custom_call.1} parent=0
    #allocation2 [shape = 'u8[8192]{0}', space=vmem, size = 0x2000, scoped, tag = 'input window, operand 0, single buffered']
    #allocation3 [shape = 's32[1]{0}', space=sflag, size = 0x4, scoped, tag = 'scoped memory for tpu_custom_call.1']
    #allocation4 [shape = 's32[1]{0}', space=sflag, size = 0x4, scoped, tag = 'scoped memory for tpu_custom_call.1']
    #allocation5 [shape = 'u8[8192]{0}', space=vmem, size = 0x2000, scoped, tag = 'input window, operand 1, single buffered']
    #allocation6 [shape = 's32[1]{0}', space=sflag, size = 0x4, scoped, tag = 'scoped memory for tpu_custom_call.1']
    #allocation7 [shape = 'u8[61440]{0}', space=vmem, size = 0xf000, scoped, tag = 'output window, operand 0, single buffered']
    %7 = vsyncpa [#allocation3], 0
    %8 = vsyncpa [#allocation6], 0
    %9 = vsyncpa [#allocation4], 0
    // Predicated region
    $region2: #{tpu_custom_call.1} parent=1 // pred_check
      _
    $region3: #{tpu_custom_call.1} parent=1 // pred_check_branch
      %11 = sbr.rel (0) target = $region5
    $region4: #{tpu_custom_call.1} parent=1 // pred_region
      %s12 = sadd.s32 0, 0
      %p13 = scmp.lt.s32.totalorder %s12, 0
      %s14 = scalar_select %p13, %s12, 0
      %s15 = smul.u32 2, %s14
      %17 = vsyncadd [#allocation3], 0
      %s18 = smul.addr %s15, 8
      %s19 = scalar_lea.hbm %s0, %s18
      %s20 = sshll.u32 %s19, 4
      %s21 = int_to_ptr.hbm [resolvable:$true] %s20
      %s22 = sshll.u32 [#allocation2], 4
      %s23 = int_to_ptr.vmem [resolvable:$true] %s22
      %28 = dma.hbm_to_vmem [thread:$0]  %s21, 256, %s23, [#allocation3], 128, 128, 8
    $region5: #{tpu_custom_call.1} parent=1 // pred_fallthru
      _
    // Predicated region
    $region6: #{tpu_custom_call.1} parent=1 // pred_check
      _
    $region7: #{tpu_custom_call.1} parent=1 // pred_check_branch
      %30 = sbr.rel (0) target = $region9
    $region8: #{tpu_custom_call.1} parent=1 // pred_region
      %s31 = sadd.s32 0, 0
      %p32 = scmp.lt.s32.totalorder %s31, 0
      %s33 = scalar_select %p32, %s31, 0
      %s34 = smul.u32 2, %s33
      %36 = vsyncadd [#allocation6], 0
      %s37 = smul.addr %s34, 8
      %s38 = scalar_lea.hbm %s1, %s37
      %s39 = sshll.u32 %s38, 4
      %s40 = int_to_ptr.hbm [resolvable:$true] %s39
      %s41 = sshll.u32 [#allocation5], 4
      %s42 = int_to_ptr.vmem [resolvable:$true] %s41
      %47 = dma.hbm_to_vmem [thread:$0]  %s40, 256, %s42, [#allocation6], 128, 128, 8
    $region9: #{tpu_custom_call.1} parent=1 // pred_fallthru
      _
    // Predicated region
    $region10: #{tpu_custom_call.1} parent=1 // pred_check
      _
    $region11: #{tpu_custom_call.1} parent=1 // pred_check_branch
      %49 = sbr.rel (0) target = $region13
    $region12: #{tpu_custom_call.1} parent=1 // pred_region
      %51 = dma.done [#allocation3], 256
    $region13: #{tpu_custom_call.1} parent=1 // pred_fallthru
      _
    // Predicated region
    $region14: #{tpu_custom_call.1} parent=1 // pred_check
      _
    $region15: #{tpu_custom_call.1} parent=1 // pred_check_branch
      %53 = sbr.rel (0) target = $region17
    $region16: #{tpu_custom_call.1} parent=1 // pred_region
      %55 = dma.done [#allocation6], 256
    $region17: #{tpu_custom_call.1} parent=1 // pred_fallthru
      _
    %s56 = sadd.s32 0, 0
    %p57 = scmp.lt.s32.totalorder %s56, 0
    %s58 = scalar_select %p57, %s56, 0
    %s59 = smul.u32 2, %s58
    %s60 = sadd.s32 0, 0
    %p61 = scmp.lt.s32.totalorder %s60, 0
    %s62 = scalar_select %p61, %s60, 0
    %s63 = smul.u32 2, %s62
    %s64 = sadd.s32 0, 0
    %p65 = scmp.eq.s32.totalorder 0, 0
    // Predicated region
    $region18: #{tpu_custom_call.1} parent=1 // pred_check
      %p66 = pneg %p65
    $region19: #{tpu_custom_call.1} parent=1 // pred_check_branch
      %68 = sbr.rel (%p66) target = $region21
    $region20: #{tpu_custom_call.1} parent=1 // pred_region
      %69 = vst [vmem:[#allocation7] sm:$0xff] 0.0
      %70 = vst [vmem:[#allocation7 + $0x8] sm:$0xff] 0.0
      %71 = vst [vmem:[#allocation7 + $0x10] sm:$0xff] 0.0
      %72 = vst [vmem:[#allocation7 + $0x18] sm:$0xff] 0.0
      %73 = vst [vmem:[#allocation7 + $0x20] sm:$0xff] 0.0
      %74 = vst [vmem:[#allocation7 + $0x28] sm:$0xff] 0.0
      %75 = vst [vmem:[#allocation7 + $0x30] sm:$0xff] 0.0
      %76 = vst [vmem:[#allocation7 + $0x38] sm:$0xff] 0.0
      %77 = vst [vmem:[#allocation7 + $0x40] sm:$0xff] 0.0
      %78 = vst [vmem:[#allocation7 + $0x48] sm:$0xff] 0.0
      %79 = vst [vmem:[#allocation7 + $0x50] sm:$0xff] 0.0
      %80 = vst [vmem:[#allocation7 + $0x58] sm:$0xff] 0.0
      %81 = vst [vmem:[#allocation7 + $0x60] sm:$0xff] 0.0
      %82 = vst [vmem:[#allocation7 + $0x68] sm:$0xff] 0.0
      %83 = vst [vmem:[#allocation7 + $0x70] sm:$0xff] 0.0
    $region21: #{tpu_custom_call.1} parent=1 // pred_fallthru
      _
    %p84 = scmp.lt.s32.totalorder %s64, 1
    // Predicated region
    $region22: #{tpu_custom_call.1} parent=1 // pred_check
      %p85 = pneg %p84
    $region23: #{tpu_custom_call.1} parent=1 // pred_check_branch
      %87 = sbr.rel (%p85) target = $region25
    $region24: #{tpu_custom_call.1} parent=1 // pred_region
      %v88 = vld [vmem:[#allocation2] sm:$0xff]
      %v89 = vld [vmem:[#allocation2 + $0x8] sm:$0xff]
      %v90 = vxor.u32 %v88, 2147483648
      %v91 = vxor.u32 %v89, 2147483648
      %v92 = vmul.f32 %v90, 1.442695
      %v93 = vpow.pop %v92
      %v94 = vmul.f32 %v91, 1.442695
      %v95 = vpow.pop %v94
      %v96 = vadd.f32 %v93, 1.0
      %v97 = vadd.f32 %v95, 1.0
      %v98 = vrcp.pop %v96
      %v99 = vmul.f32 %v96, %v98
      %v100 = vsub.f32 1.0, %v99
      %v101 = vmul.f32 %v98, %v100
      %v102 = vadd.f32 %v98, %v101
      %vm103 = vweird.f32 %v96
      %vm104 = vweird.f32 %v98
      %vm105 = vmor %vm103, %vm104
      %v106 = vsel %vm105, %v98, %v102
      %v107 = vand.u32 2147483647, %v96
      %vm108 = vcmp.eq.f32.partialorder %v107, 8.507059e+37
      %v109 = vand.u32 %v96, 2147483648
      %v110 = vor.u32 1.1754944e-38, %v109
      %v111 = vsel %vm108, %v110, %v106
      %v112 = vmul.f32 1.0, %v111
      %v113 = vrcp.pop %v97
      %v114 = vmul.f32 %v97, %v113
      %v115 = vsub.f32 1.0, %v114
      %v116 = vmul.f32 %v113, %v115
      %v117 = vadd.f32 %v113, %v116
      %vm118 = vweird.f32 %v97
      %vm119 = vweird.f32 %v113
      %vm120 = vmor %vm118, %vm119
      %v121 = vsel %vm120, %v113, %v117
      %v122 = vand.u32 2147483647, %v97
      %vm123 = vcmp.eq.f32.partialorder %v122, 8.507059e+37
      %v124 = vand.u32 %v97, 2147483648
      %v125 = vor.u32 1.1754944e-38, %v124
      %v126 = vsel %vm123, %v125, %v121
      %v127 = vmul.f32 1.0, %v126
      %vm128 = vcmp.gt.f32.partialorder %v88, 0.0
      %vm129 = vcmp.gt.f32.partialorder %v89, 0.0
      %v130 = vld [vmem:[#allocation5] sm:$0xff]
      %v131 = vld [vmem:[#allocation5 + $0x8] sm:$0xff]
      %vm132 = vcmp.ne.s32.totalorder %v130, 0
      %vm133 = vcmp.ne.s32.totalorder %v131, 0
      %vm134 = vmxor %vm128, %vm132
      %vm135 = vmxor %vm129, %vm133
      %vm136 = vmxor %vm134, 1
      %vm137 = vmxor %vm135, 1
      %v138 = vsel %vm136, 1, 0
      %v139 = vsel %vm137, 1, 0
      %v140 = vcvt.s32.f32 %v138
      %v141 = vcvt.s32.f32 %v139
      %v142 = vsub.f32 %v112, %v140
      %v143 = vsub.f32 %v127, %v141
      %vm144 = vcmp.gt.f32.partialorder %v112, 0.0
      %vm145 = vcmp.gt.f32.partialorder %v127, 0.0
      %v146 = vld [vmem:[#allocation7] sm:$0xff]
      %v147 = vsel %vm144, %v142, 0.0
      %v148 = vsel %vm145, %v143, 0.0
      %v149 = vadd.f32 %v147, %v148
      %v150 = vadd.f32 %v146, %v149
      %151 = vst [vmem:[#allocation7] sm:$0xff] %v150
      %vm152 = vcmp.gt.f32.partialorder %v112, 0.06666667
      %vm153 = vcmp.gt.f32.partialorder %v127, 0.06666667
      %s154 = scalar_lea.vmem [#allocation7], 8
      %v155 = vld [vmem:[%s154] sm:$0xff]
      %v156 = vsel %vm152, %v142, 0.0
      %v157 = vsel %vm153, %v143, 0.0
      %v158 = vadd.f32 %v156, %v157
      %v159 = vadd.f32 %v155, %v158
      %160 = vst [vmem:[%s154] sm:$0xff] %v159
      %vm161 = vcmp.gt.f32.partialorder %v112, 0.13333334
      %vm162 = vcmp.gt.f32.partialorder %v127, 0.13333334
      %s163 = scalar_lea.vmem [#allocation7], 16
      %v164 = vld [vmem:[%s163] sm:$0xff]
      %v165 = vsel %vm161, %v142, 0.0
      %v166 = vsel %vm162, %v143, 0.0
      %v167 = vadd.f32 %v165, %v166
      %v168 = vadd.f32 %v164, %v167
      %169 = vst [vmem:[%s163] sm:$0xff] %v168
      %vm170 = vcmp.gt.f32.partialorder %v112, 0.2
      %vm171 = vcmp.gt.f32.partialorder %v127, 0.2
      %s172 = scalar_lea.vmem [#allocation7], 24
      %v173 = vld [vmem:[%s172] sm:$0xff]
      %v174 = vsel %vm170, %v142, 0.0
      %v175 = vsel %vm171, %v143, 0.0
      %v176 = vadd.f32 %v174, %v175
      %v177 = vadd.f32 %v173, %v176
      %178 = vst [vmem:[%s172] sm:$0xff] %v177
      %vm179 = vcmp.gt.f32.partialorder %v112, 0.26666668
      %vm180 = vcmp.gt.f32.partialorder %v127, 0.26666668
      %s181 = scalar_lea.vmem [#allocation7], 32
      %v182 = vld [vmem:[%s181] sm:$0xff]
      %v183 = vsel %vm179, %v142, 0.0
      %v184 = vsel %vm180, %v143, 0.0
      %v185 = vadd.f32 %v183, %v184
      %v186 = vadd.f32 %v182, %v185
      %187 = vst [vmem:[%s181] sm:$0xff] %v186
      %vm188 = vcmp.gt.f32.partialorder %v112, 0.33333334
      %vm189 = vcmp.gt.f32.partialorder %v127, 0.33333334
      %s190 = scalar_lea.vmem [#allocation7], 40
      %v191 = vld [vmem:[%s190] sm:$0xff]
      %v192 = vsel %vm188, %v142, 0.0
      %v193 = vsel %vm189, %v143, 0.0
      %v194 = vadd.f32 %v192, %v193
      %v195 = vadd.f32 %v191, %v194
      %196 = vst [vmem:[%s190] sm:$0xff] %v195
      %vm197 = vcmp.gt.f32.partialorder %v112, 0.4
      %vm198 = vcmp.gt.f32.partialorder %v127, 0.4
      %s199 = scalar_lea.vmem [#allocation7], 48
      %v200 = vld [vmem:[%s199] sm:$0xff]
      %v201 = vsel %vm197, %v142, 0.0
      %v202 = vsel %vm198, %v143, 0.0
      %v203 = vadd.f32 %v201, %v202
      %v204 = vadd.f32 %v200, %v203
      %205 = vst [vmem:[%s199] sm:$0xff] %v204
      %vm206 = vcmp.gt.f32.partialorder %v112, 0.46666667
      %vm207 = vcmp.gt.f32.partialorder %v127, 0.46666667
      %s208 = scalar_lea.vmem [#allocation7], 56
      %v209 = vld [vmem:[%s208] sm:$0xff]
      %v210 = vsel %vm206, %v142, 0.0
      %v211 = vsel %vm207, %v143, 0.0
      %v212 = vadd.f32 %v210, %v211
      %v213 = vadd.f32 %v209, %v212
      %214 = vst [vmem:[%s208] sm:$0xff] %v213
      %vm215 = vcmp.gt.f32.partialorder %v112, 0.53333336
      %vm216 = vcmp.gt.f32.partialorder %v127, 0.53333336
      %s217 = scalar_lea.vmem [#allocation7], 64
      %v218 = vld [vmem:[%s217] sm:$0xff]
      %v219 = vsel %vm215, %v142, 0.0
      %v220 = vsel %vm216, %v143, 0.0
      %v221 = vadd.f32 %v219, %v220
      %v222 = vadd.f32 %v218, %v221
      %223 = vst [vmem:[%s217] sm:$0xff] %v222
      %vm224 = vcmp.gt.f32.partialorder %v112, 0.6
      %vm225 = vcmp.gt.f32.partialorder %v127, 0.6
      %s226 = scalar_lea.vmem [#allocation7], 72
      %v227 = vld [vmem:[%s226] sm:$0xff]
      %v228 = vsel %vm224, %v142, 0.0
      %v229 = vsel %vm225, %v143, 0.0
      %v230 = vadd.f32 %v228, %v229
      %v231 = vadd.f32 %v227, %v230
      %232 = vst [vmem:[%s226] sm:$0xff] %v231
      %vm233 = vcmp.gt.f32.partialorder %v112, 0.6666667
      %vm234 = vcmp.gt.f32.partialorder %v127, 0.6666667
      %s235 = scalar_lea.vmem [#allocation7], 80
      %v236 = vld [vmem:[%s235] sm:$0xff]
      %v237 = vsel %vm233, %v142, 0.0
      %v238 = vsel %vm234, %v143, 0.0
      %v239 = vadd.f32 %v237, %v238
      %v240 = vadd.f32 %v236, %v239
      %241 = vst [vmem:[%s235] sm:$0xff] %v240
      %vm242 = vcmp.gt.f32.partialorder %v112, 0.73333335
      %vm243 = vcmp.gt.f32.partialorder %v127, 0.73333335
      %s244 = scalar_lea.vmem [#allocation7], 88
      %v245 = vld [vmem:[%s244] sm:$0xff]
      %v246 = vsel %vm242, %v142, 0.0
      %v247 = vsel %vm243, %v143, 0.0
      %v248 = vadd.f32 %v246, %v247
      %v249 = vadd.f32 %v245, %v248
      %250 = vst [vmem:[%s244] sm:$0xff] %v249
      %vm251 = vcmp.gt.f32.partialorder %v112, 0.8
      %vm252 = vcmp.gt.f32.partialorder %v127, 0.8
      %s253 = scalar_lea.vmem [#allocation7], 96
      %v254 = vld [vmem:[%s253] sm:$0xff]
      %v255 = vsel %vm251, %v142, 0.0
      %v256 = vsel %vm252, %v143, 0.0
      %v257 = vadd.f32 %v255, %v256
      %v258 = vadd.f32 %v254, %v257
      %259 = vst [vmem:[%s253] sm:$0xff] %v258
      %vm260 = vcmp.gt.f32.partialorder %v112, 0.8666667
      %vm261 = vcmp.gt.f32.partialorder %v127, 0.8666667
      %s262 = scalar_lea.vmem [#allocation7], 104
      %v263 = vld [vmem:[%s262] sm:$0xff]
      %v264 = vsel %vm260, %v142, 0.0
      %v265 = vsel %vm261, %v143, 0.0
      %v266 = vadd.f32 %v264, %v265
      %v267 = vadd.f32 %v263, %v266
      %268 = vst [vmem:[%s262] sm:$0xff] %v267
      %vm269 = vcmp.gt.f32.partialorder %v112, 0.93333334
      %vm270 = vcmp.gt.f32.partialorder %v127, 0.93333334
      %s271 = scalar_lea.vmem [#allocation7], 112
      %v272 = vld [vmem:[%s271] sm:$0xff]
      %v273 = vsel %vm269, %v142, 0.0
      %v274 = vsel %vm270, %v143, 0.0
      %v275 = vadd.f32 %v273, %v274
      %v276 = vadd.f32 %v272, %v275
      %277 = vst [vmem:[%s271] sm:$0xff] %v276
    $region25: #{tpu_custom_call.1} parent=1 // pred_fallthru
      _
    // Predicated region
    $region26: #{tpu_custom_call.1} parent=1 // pred_check
      _
    $region27: #{tpu_custom_call.1} parent=1 // pred_check_branch
      %279 = sbr.rel (0) target = $region29
    $region28: #{tpu_custom_call.1} parent=1 // pred_region
      %281 = vsyncadd [#allocation4], 0
      %s282 = sshll.u32 [#allocation7], 4
      %s283 = int_to_ptr.vmem [resolvable:$true] %s282
      %s284 = sshll.u32 %s2, 4
      %s285 = int_to_ptr.hbm [resolvable:$true] %s284
      %290 = dma.vmem_to_hbm [thread:$0]  %s283, 1920, %s285, [#allocation4], 128, 128, 8
    $region29: #{tpu_custom_call.1} parent=1 // pred_fallthru
      _
    // Predicated region
    $region30: #{tpu_custom_call.1} parent=1 // pred_check
      _
    $region31: #{tpu_custom_call.1} parent=1 // pred_check_branch
      %292 = sbr.rel (0) target = $region33
    $region32: #{tpu_custom_call.1} parent=1 // pred_region
      %294 = dma.done [#allocation4], 1920
    $region33: #{tpu_custom_call.1} parent=1 // pred_fallthru
      _
    %295 = vsyncpa [#allocation3], 1
    %296 = vsyncpa [#allocation6], 1
    %297 = vsyncpa [#allocation4], 1

</llo_original>
